<compile_context>
chip_gen: v5e
topology: v5e:2x2
jax: 0.10.0
libtpu: 0.0.40
codegen_flags: <defaults>
</compile_context>

<pallas_src>
import jax
import jax.numpy as jnp
import numpy as np
from jax.experimental import pallas as pl
from jax.experimental.pallas import tpu as pltpu


_CONST_ROW_BYTES = 512  # a (br, 2) f32 constant block lane-pads to (br, 128) in VMEM


def _scaling_kernel(consts_ref, x_ref, o_ref):
    # consts_ref: (BR, 2) f32 -- column 0 = shift, column 1 = scale (per row/channel)
    # x_ref / o_ref: (BR, BL) lane-dense slab blocks
    c = consts_ref[...]
    shift = c[:, 0:1]
    scale = c[:, 1:2]
    x = x_ref[...].astype(jnp.float32)
    # True divide for bit-parity with the PyTorch forward; HBM-bound kernel,
    # so the EUP/VPU cost of the divide is hidden.
    o_ref[...] = ((x - shift) / scale).astype(o_ref.dtype)


def _round_up(x, m):
    return ((x + m - 1) // m) * m


def _round_down(x, m):
    return (x // m) * m


def _tpu_budget():
    """Per-generation x/out block byte budget and dual-TensorCore flag."""
    kind = ""
    try:
        kind = jax.devices()[0].device_kind.lower()
    except Exception:
        pass
    if "v7" in kind:
        # 64 MiB physical / 32 MiB default scoped VMEM; 2x(in)+2x(out) at 4 MiB
        # each stays well inside the default scoped budget. Two TensorCores.
        return 4 * 1024 * 1024, True
    if "v6" in kind:
        return 4 * 1024 * 1024, False
    # v5e (16 MiB default scoped VMEM) and unknown parts: conservative.
    return 2 * 1024 * 1024, False


def _sublane_multiple(dtype):
    # 8 for f32, 16 for bf16, 32 for int8/fp8 (sub-32-bit dtypes pack sublanes).
    bits = jnp.dtype(dtype).itemsize * 8
    return max(8, 256 // bits)


def _choose_block(rows, cols, dtype_bytes, *, max_block_bytes, sublane, dual_tc):
    """Byte-budgeted (br, bl) obeying the (8,128) rule; lane dim grows first."""
    cols_pad = _round_up(cols, 128)
    min_lane = cols if cols < 128 else 128

    def lane_fit(n_rows):
        budget = max(max_block_bytes - n_rows * _CONST_ROW_BYTES, 0)
        if budget >= n_rows * cols_pad * dtype_bytes:
            return cols                                    # full lane extent (legal)
        fit = _round_down(budget // max(n_rows * dtype_bytes, 1), 128)
        if fit >= cols:
            return cols
        return max(fit, min_lane)

    br = rows
    min_row_bytes = _CONST_ROW_BYTES + min(cols_pad, 128) * dtype_bytes
    if rows * min_row_bytes > max_block_bytes and rows > sublane:
        # rows is large even for a 128-wide lane stripe: budget the sublane dim.
        br = _round_down(max_block_bytes // min_row_bytes, sublane)
        br = max(min(br, rows), sublane)
    bl = lane_fit(br)

    # v7x (two TensorCores): keep the "parallel" grid at an even, >=2 step count
    # with roughly balanced blocks. Single-TC parts keep the largest block.
    if dual_tc:
        gi, gj = pl.cdiv(rows, br), pl.cdiv(cols, bl)
        if (gi * gj) % 2 != 0:
            if cols > 128:
                for t in range(gj + 1, gj + 9, 2):
                    cand = _round_up(pl.cdiv(cols, t), 128)
                    if cand >= 128 and pl.cdiv(cols, cand) % 2 == 0:
                        bl = cand
                        break
            elif rows >= 2 * sublane:
                for t in range(gi + 1, gi + 9, 2):
                    cand = _round_up(pl.cdiv(rows, t), sublane)
                    if cand >= sublane and pl.cdiv(rows, cand) % 2 == 0:
                        br = cand
                        break
    return br, bl


def scaling_layer(x, shift, scale):
    """Pallas equivalent of ScalingLayer.forward: (x - shift) / scale.

    x: (N, C, H, W); shift, scale: (C,) per-channel constants.
    """
    N, C, H, W = x.shape
    rows, cols = N * C, H * W
    dtype_bytes = jnp.dtype(x.dtype).itemsize

    # Each (n, c) plane is contiguous in NCHW, so this reshape is free layout
    # plumbing exposing a lane-dense (N*C, H*W) slab.
    x2d = x.reshape(rows, cols)

    # Per-row constants packed into a single (rows, 2) f32 array: col 0 = shift,
    # col 1 = scale. One lane-padded DMA stream instead of two.
    consts2d = jnp.stack(
        [jnp.tile(shift.astype(jnp.float32), N),
         jnp.tile(scale.astype(jnp.float32), N)], axis=1)

    max_block_bytes, dual_tc = _tpu_budget()
    br, bl = _choose_block(
        rows, cols, dtype_bytes,
        max_block_bytes=max_block_bytes,
        sublane=_sublane_multiple(x.dtype),
        dual_tc=dual_tc)
    grid = (pl.cdiv(rows, br), pl.cdiv(cols, bl))

    out2d = pl.pallas_call(
        _scaling_kernel,
        out_shape=jax.ShapeDtypeStruct((rows, cols), x.dtype),
        grid=grid,
        in_specs=[
            pl.BlockSpec((br, 2), lambda i, j: (i, 0)),    # packed shift/scale
            pl.BlockSpec((br, bl), lambda i, j: (i, j)),   # x slab
        ],
        out_specs=pl.BlockSpec((br, bl), lambda i, j: (i, j)),
        compiler_params=pltpu.CompilerParams(
            dimension_semantics=("parallel", "parallel"),
        ),
        cost_estimate=pl.CostEstimate(
            flops=2 * rows * cols,
            transcendentals=rows * cols,            # the divide
            bytes_accessed=2 * rows * cols * dtype_bytes + rows * 8,
        ),
    )(consts2d, x2d)

    return out2d.reshape(N, C, H, W)


if __name__ == "__main__":
    # Deterministic buffers exactly as in the PyTorch module __init__ (C=3).
    shift = jnp.asarray([-0.030, -0.088, -0.188], dtype=jnp.float32)
    scale = jnp.asarray([0.458, 0.448, 0.450], dtype=jnp.float32)

    key = jax.random.PRNGKey(0)
    x = jax.random.normal(key, (2, 3, 16, 16), dtype=jnp.float32)

    out = scaling_layer(x, shift, scale)
    out = jax.block_until_ready(out)

    # Reference: plain JAX broadcast semantics (matches PyTorch forward).
    ref = (x - shift[None, :, None, None]) / scale[None, :, None, None]
    np.testing.assert_allclose(np.asarray(out), np.asarray(ref), rtol=1e-6, atol=1e-6)

    print("KERNEL_OK")
</pallas_src>

<mosaic_0001>
module attributes {stable_mosaic.version = 11 : i64} {
  func.func @_scaling_kernel(%arg0: i32, %arg1: i32, %arg2: memref<6x2xf32, #tpu.memory_space<vmem>>, %arg3: memref<6x256xf32, #tpu.memory_space<vmem>>, %arg4: memref<6x256xf32, #tpu.memory_space<vmem>>) attributes {dimension_semantics = [#tpu.dimension_semantics<parallel>, #tpu.dimension_semantics<parallel>], iteration_bounds = array<i64: 1, 1>, scalar_prefetch = 0 : i64, scratch_operands = 0 : i64, tpu.core_type = #tpu.core_type<tc>, window_params = [{transform_indices = @transform_0, window_bounds = array<i64: 6, 2>}, {transform_indices = @transform_1, window_bounds = array<i64: 6, 256>}, {transform_indices = @transform_2, window_bounds = array<i64: 6, 256>}]} {
    %c0 = arith.constant 0 : index
    %c0_0 = arith.constant 0 : index
    %0 = vector.load %arg2[%c0, %c0_0] : memref<6x2xf32, #tpu.memory_space<vmem>>, vector<6x2xf32>
    %1 = vector.extract_strided_slice %0 {offsets = [0, 0], sizes = [6, 1], strides = [1, 1]} : vector<6x2xf32> to vector<6x1xf32>
    %2 = vector.extract_strided_slice %0 {offsets = [0, 1], sizes = [6, 1], strides = [1, 1]} : vector<6x2xf32> to vector<6x1xf32>
    %c0_1 = arith.constant 0 : index
    %c0_2 = arith.constant 0 : index
    %3 = vector.load %arg3[%c0_1, %c0_2] : memref<6x256xf32, #tpu.memory_space<vmem>>, vector<6x256xf32>
    %4 = vector.broadcast %1 : vector<6x1xf32> to vector<6x256xf32>
    %5 = arith.subf %3, %4 : vector<6x256xf32>
    %6 = vector.broadcast %2 : vector<6x1xf32> to vector<6x256xf32>
    %7 = arith.divf %5, %6 : vector<6x256xf32>
    %c0_3 = arith.constant 0 : index
    %c0_4 = arith.constant 0 : index
    %8 = vector.load %arg4[%c0_3, %c0_4] : memref<6x256xf32, #tpu.memory_space<vmem>>, vector<6x256xf32>
    tpu.vector_store %arg4[%c0_3, %c0_4], %7 {strides = array<i32>} : memref<6x256xf32, #tpu.memory_space<vmem>>, vector<6x256xf32>,
    return
  }
  func.func @transform_0(%arg0: i32, %arg1: i32) -> (i32, i32) {
    %c0_i32 = arith.constant 0 : i32
    %c0_i32_0 = arith.constant 0 : i32
    return %arg0, %c0_i32 : i32, i32
  }
  func.func @transform_1(%arg0: i32, %arg1: i32) -> (i32, i32) {
    %c0_i32 = arith.constant 0 : i32
    return %arg0, %arg1 : i32, i32
  }
  func.func @transform_2(%arg0: i32, %arg1: i32) -> (i32, i32) {
    %c0_i32 = arith.constant 0 : i32
    return %arg0, %arg1 : i32, i32
  }
}

</mosaic_0001>

<llo_original>
// kernel: tpu_custom_call.1
$region0: #{tpu_custom_call.1}
  #allocation0 [shape = 'u32[]', space=smem, size = 0x4, offset = 0x4, fixed_abs, tag = 'smem constant byte address 0x4 - core index']
  #allocation1 [shape = 'u32[72,128]{1,0:T(1,128)}', space=vmem, size = 0x9000, scoped, tag = 'internal scratch']
  %s0 = inlined_call_operand.vmem [shape: f32[6,2], index: 0, kind: input, shape index: {}]
  %s1 = inlined_call_operand.hbm [shape: f32[6,256], index: 1, kind: input, shape index: {}]
  %s2 = inlined_call_operand.hbm [shape: f32[6,256], index: 2, kind: output, shape index: {}]
  %s3 = sld [smem:[#allocation0]]
  $region22: #{tpu_custom_call.1} parent=0
    _
  %s5 = ssub.s32 1, %s3
  %s6 = scalar_select 0, %s5, %s3
  $region1: #{tpu_custom_call.1} parent=0
    #allocation2 [shape = 'u8[8192]{0}', space=vmem, size = 0x2000, scoped, tag = 'input window, operand 1, single buffered']
    #allocation3 [shape = 's32[1]{0}', space=sflag, size = 0x4, scoped, tag = 'scoped memory for tpu_custom_call.1']
    #allocation4 [shape = 's32[1]{0}', space=sflag, size = 0x4, scoped, tag = 'scoped memory for tpu_custom_call.1']
    #allocation5 [shape = 'u8[8192]{0}', space=vmem, size = 0x2000, scoped, tag = 'output window, operand 0, single buffered']
    %7 = vsyncpa [#allocation3], 0
    %8 = vsyncpa [#allocation4], 0
    // Predicated region
    $region2: #{tpu_custom_call.1} parent=1 // pred_check
      _
    $region3: #{tpu_custom_call.1} parent=1 // pred_check_branch
      %10 = sbr.rel (0) target = $region5
    $region4: #{tpu_custom_call.1} parent=1 // pred_region
      _
    $region5: #{tpu_custom_call.1} parent=1 // pred_fallthru
      _
    // Predicated region
    $region6: #{tpu_custom_call.1} parent=1 // pred_check
      _
    $region7: #{tpu_custom_call.1} parent=1 // pred_check_branch
      %12 = sbr.rel (0) target = $region9
    $region8: #{tpu_custom_call.1} parent=1 // pred_region
      %14 = vsyncadd [#allocation3], 0
      %s16 = sshll.u32 %s1, 4
      %s17 = int_to_ptr.hbm [resolvable:$true] %s16
      %s18 = sshll.u32 [#allocation2], 4
      %s19 = int_to_ptr.vmem [resolvable:$true] %s18
      %21 = dma.hbm_to_vmem [thread:$0]  %s17, 256, %s19, [#allocation3]
    $region9: #{tpu_custom_call.1} parent=1 // pred_fallthru
      _
    // Predicated region
    $region10: #{tpu_custom_call.1} parent=1 // pred_check
      _
    $region11: #{tpu_custom_call.1} parent=1 // pred_check_branch
      %23 = sbr.rel (0) target = $region13
    $region12: #{tpu_custom_call.1} parent=1 // pred_region
      %25 = dma.done [#allocation3], 256
    $region13: #{tpu_custom_call.1} parent=1 // pred_fallthru
      _
    %v26 = vld [vmem:[%s0] sm:$0x3f]
    %v27 = vld [vmem:[#allocation2] sm:$0x3f]
    %v28 = vld [vmem:[#allocation2 + $0x8] sm:$0x3f]
    %30 = vset.pattern.permute.xlu0 0
    %31 = vperm.xlu0 %30, %v26
    %v32 = vpop.permute.xlu0 %31
    %v34 = vsub.f32 %v27, %v32
    %v35 = vsub.f32 %v28, %v32
    %36 = vset.pattern.permute.xlu0 1
    %37 = vperm.xlu0 %36, %v26
    %v38 = vpop.permute.xlu0 %37
    %v40 = vrcp.pop %v38
    %v41 = vmul.f32 %v38, %v40
    %v42 = vsub.f32 1.0, %v41
    %v43 = vmul.f32 %v40, %v42
    %v44 = vadd.f32 %v40, %v43
    %vm45 = vweird.f32 %v38
    %vm46 = vweird.f32 %v40
    %vm47 = vmor %vm45, %vm46
    %v48 = vsel %vm47, %v40, %v44
    %v49 = vand.u32 2147483647, %v38
    %vm50 = vcmp.eq.f32.partialorder %v49, 8.507059e+37
    %v51 = vand.u32 %v38, 2147483648
    %v52 = vor.u32 1.1754944e-38, %v51
    %v53 = vsel %vm50, %v52, %v48
    %v54 = vmul.f32 %v34, %v53
    %v55 = vmul.f32 %v35, %v53
    %56 = vst [vmem:[#allocation5] sm:$0x3f] %v54
    %57 = vst [vmem:[#allocation5 + $0x8] sm:$0x3f] %v55
    // Predicated region
    $region14: #{tpu_custom_call.1} parent=1 // pred_check
      _
    $region15: #{tpu_custom_call.1} parent=1 // pred_check_branch
      %59 = sbr.rel (0) target = $region17
    $region16: #{tpu_custom_call.1} parent=1 // pred_region
      %61 = vsyncadd [#allocation4], 0
      %s63 = sshll.u32 [#allocation5], 4
      %s64 = int_to_ptr.vmem [resolvable:$true] %s63
      %s65 = sshll.u32 %s2, 4
      %s66 = int_to_ptr.hbm [resolvable:$true] %s65
      %68 = dma.vmem_to_hbm [thread:$0]  %s64, 256, %s66, [#allocation4]
    $region17: #{tpu_custom_call.1} parent=1 // pred_fallthru
      _
    // Predicated region
    $region18: #{tpu_custom_call.1} parent=1 // pred_check
      _
    $region19: #{tpu_custom_call.1} parent=1 // pred_check_branch
      %70 = sbr.rel (0) target = $region21
    $region20: #{tpu_custom_call.1} parent=1 // pred_region
      %72 = dma.done [#allocation4], 256
    $region21: #{tpu_custom_call.1} parent=1 // pred_fallthru
      _
    %73 = vsyncpa [#allocation3], 1
    %74 = vsyncpa [#allocation4], 1

</llo_original>
